<compile_context>
chip_gen: v5e
topology: v5e:2x2
jax: 0.10.0
libtpu: 0.0.40
codegen_flags: <defaults>
</compile_context>

<pallas_src>
import jax
import jax.numpy as jnp
from jax.experimental import pallas as pl
from jax.experimental.pallas import tpu as pltpu


def _round_up(x, m):
    return ((x + m - 1) // m) * m


def _num_tensorcores_per_chip():
    # v7x exposes 2 TensorCores per chip (sharded via dimension_semantics);
    # v5e / v6e have 1.  Fall back to 1 if the device kind is unknown.
    try:
        kind = jax.devices()[0].device_kind.lower()
    except Exception:
        return 1
    return 2 if "v7" in kind else 1


def _rigid_kernel(w_ref, t_ref, x_ref, o_ref):
    # w_ref: (J, TN)  skinning weights (points in lanes), f32 or bf16
    # t_ref: (12, J)  transposed flattened 3x4 joint transforms, f32 (resident)
    # x_ref: (3, TN)  gaussian centers, f32
    # o_ref: (3, TN)  deformed centers, f32
    w = w_ref[...]
    # Cast the tiny (12, J) transform block to the weight dtype at use-site so
    # its HBM copy stays f32 while the MXU sees matched operand dtypes.
    t = t_ref[...].astype(w.dtype)
    # Blend transforms across joints: (12, J) @ (J, TN) -> (12, TN), f32 accum.
    A = jnp.dot(t, w, preferred_element_type=jnp.float32)
    x0 = x_ref[0:1, :]
    x1 = x_ref[1:2, :]
    x2 = x_ref[2:3, :]
    # Per-point homogeneous 3x4 apply: lane-dense VPU FMAs, one full-width
    # (unmasked) row store each -- no concat, no narrow masked stores.
    o_ref[0:1, :] = A[0:1, :] * x0 + A[1:2, :] * x1 + A[2:3, :] * x2 + A[3:4, :]
    o_ref[1:2, :] = A[4:5, :] * x0 + A[5:6, :] * x1 + A[6:7, :] * x2 + A[7:8, :]
    o_ref[2:3, :] = A[8:9, :] * x0 + A[9:10, :] * x1 + A[10:11, :] * x2 + A[11:12, :]


def _vmem_bytes_per_step(tn_eff, J, w_itemsize):
    # Double-buffered weights/xyz/out tiles + resident transforms + the (12, tn)
    # f32 blended-transform intermediate (spills to VMEM above tn~4096; that
    # traffic hides under the HBM DMA, so it is fine -- just budget for it).
    return (2 * J * tn_eff * w_itemsize
            + 2 * 3 * tn_eff * 4
            + 2 * 3 * tn_eff * 4
            + 2 * 12 * J * 4
            + 12 * tn_eff * 4)


def rigid_deform(weights_jn, transforms_12j, xyz_3n, *, tn=32768,
                 weights_dtype=jnp.bfloat16,
                 vmem_budget_bytes=20 * 1024 * 1024):
    """Feature-major rigid deform (linear blend skinning of centers).

    weights_jn     : (J, N) skinning weights (points in the lane dim)
    transforms_12j : (12, J) float32 transposed flattened 3x4 joint transforms
    xyz_3n         : (3, N) float32 gaussian centers
    returns        : (3, N) float32 deformed centers
    """
    J, N = weights_jn.shape
    assert transforms_12j.shape == (12, J)
    assert xyz_3n.shape == (3, N)

    # Narrow only the dominant weights stream (MXU accumulates in f32 anyway);
    # transforms stay f32 in HBM and are cast inside the kernel.
    if weights_dtype is not None and weights_jn.dtype != weights_dtype:
        weights_jn = weights_jn.astype(weights_dtype)
    transforms_12j = transforms_12j.astype(jnp.float32)
    xyz_3n = xyz_3n.astype(jnp.float32)
    w_itemsize = jnp.dtype(weights_jn.dtype).itemsize

    # ---- tile selection ------------------------------------------------------
    n_round = _round_up(N, 128)
    tn_eff = min(_round_up(tn, 128), n_round)

    ncores = _num_tensorcores_per_chip()
    if ncores > 1:
        # >=2 tiles per TensorCore so BlockSpec double-buffering overlaps the
        # weights DMA with compute on each core; single-TC chips get no clamp
        # (fewest, largest tiles is strictly better there).
        tn_eff = max(128, min(tn_eff, _round_up(pl.cdiv(N, 2 * ncores), 128)))

    # Stay comfortably under the scoped-VMEM default on every generation
    # (v7x physical VMEM is only 64 MiB).
    while tn_eff > 128 and _vmem_bytes_per_step(tn_eff, J, w_itemsize) > vmem_budget_bytes:
        tn_eff = max(128, _round_up(tn_eff // 2, 128))

    grid = (pl.cdiv(N, tn_eff),)

    # No wrapper-side pad / slice: Pallas clips the ragged last block's output
    # writeback to (3, N); OOB weight columns only produce garbage in lanes
    # that are never written back.
    cost = pl.CostEstimate(
        flops=2 * N * J * 12 + 18 * N,
        transcendentals=0,
        bytes_accessed=N * J * w_itemsize + 3 * N * 4 + 3 * N * 4 + 12 * J * 4,
    )

    out = pl.pallas_call(
        _rigid_kernel,
        out_shape=jax.ShapeDtypeStruct((3, N), jnp.float32),
        grid_spec=pltpu.PrefetchScalarGridSpec(
            num_scalar_prefetch=0,
            grid=grid,
            in_specs=[
                pl.BlockSpec((J, tn_eff), lambda i: (0, i)),   # weights tile
                pl.BlockSpec((12, J), lambda i: (0, 0)),       # transforms, resident
                pl.BlockSpec((3, tn_eff), lambda i: (0, i)),   # xyz tile
            ],
            out_specs=pl.BlockSpec((3, tn_eff), lambda i: (0, i)),
        ),
        compiler_params=pltpu.CompilerParams(
            dimension_semantics=("parallel",),
        ),
        cost_estimate=cost,
    )(weights_jn, transforms_12j, xyz_3n)

    return out


def _make_rigid_transforms(J):
    """Deterministic per-joint 3x4 rigid transforms (rotation about z + translation)."""
    angles = jnp.arange(J, dtype=jnp.float32) * 0.25
    c, s = jnp.cos(angles), jnp.sin(angles)
    zeros = jnp.zeros_like(c)
    ones = jnp.ones_like(c)
    R = jnp.stack(
        [jnp.stack([c, -s, zeros], axis=-1),
         jnp.stack([s, c, zeros], axis=-1),
         jnp.stack([zeros, zeros, ones], axis=-1)],
        axis=-2,
    )  # (J, 3, 3)
    t = jnp.stack(
        [0.1 * jnp.arange(J, dtype=jnp.float32),
         -0.05 * jnp.arange(J, dtype=jnp.float32),
         0.02 * jnp.ones((J,), jnp.float32)],
        axis=-1,
    )  # (J, 3)
    T = jnp.concatenate([R, t[:, :, None]], axis=-1)  # (J, 3, 4)
    return T.reshape(J, 12).astype(jnp.float32)


if __name__ == "__main__":
    key = jax.random.PRNGKey(0)
    N, J = 256, 24  # gaussians, joints (SMPL-like)

    k1, k2 = jax.random.split(key)
    xyz = jax.random.normal(k1, (N, 3), dtype=jnp.float32)         # (N, 3)
    logits = jax.random.normal(k2, (N, J), dtype=jnp.float32)
    weights = jax.nn.softmax(logits, axis=-1).astype(jnp.float32)  # (N, J)
    transforms_flat = _make_rigid_transforms(J)                    # (J, 12)

    # Feature-major inputs for the kernel (points live in the 128-lane dim).
    weights_jn = weights.T                # (J, N)
    transforms_12j = transforms_flat.T    # (12, J)
    xyz_3n = xyz.T                        # (3, N)

    # Pure-JAX f32 reference (point-major).
    xyz_h = jnp.concatenate([xyz, jnp.ones((N, 1), jnp.float32)], axis=-1)   # (N, 4)
    A_ref = weights @ transforms_flat                                        # (N, 12)
    ref = jnp.einsum("nkd,nd->nk", A_ref.reshape(N, 3, 4), xyz_h)            # (N, 3)

    # Default path: bf16 weight stream, f32 transforms / accumulation.
    out_bf16 = jax.block_until_ready(
        rigid_deform(weights_jn, transforms_12j, xyz_3n))          # (3, N)
    assert out_bf16.shape == (3, N)
    assert jnp.allclose(out_bf16.T, ref, atol=3e-2, rtol=3e-2), \
        "bf16-weights path mismatch vs reference"

    # Full-f32 path (tighter check; differences only from MXU default precision).
    out_f32 = jax.block_until_ready(
        rigid_deform(weights_jn, transforms_12j, xyz_3n, weights_dtype=jnp.float32))
    assert jnp.allclose(out_f32.T, ref, atol=2e-2, rtol=1e-3), \
        "f32-weights path mismatch vs reference"

    print("KERNEL_OK")
</pallas_src>

<mosaic_0001>
module attributes {stable_mosaic.version = 11 : i64} {
  func.func @_rigid_kernel(%arg0: i32, %arg1: memref<24x256xbf16, #tpu.memory_space<vmem>>, %arg2: memref<12x24xf32, #tpu.memory_space<vmem>>, %arg3: memref<3x256xf32, #tpu.memory_space<vmem>>, %arg4: memref<3x256xf32, #tpu.memory_space<vmem>>) attributes {dimension_semantics = [#tpu.dimension_semantics<parallel>], iteration_bounds = array<i64: 1>, scalar_prefetch = 0 : i64, scratch_operands = 0 : i64, tpu.core_type = #tpu.core_type<tc>, window_params = [{transform_indices = @transform_0, window_bounds = array<i64: 24, 256>}, {pipeline_mode = #tpu.pipeline_mode<synchronous>, transform_indices = @transform_1, window_bounds = array<i64: 12, 24>}, {transform_indices = @transform_2, window_bounds = array<i64: 3, 256>}, {transform_indices = @transform_3, window_bounds = array<i64: 3, 256>}]} {
    %c0 = arith.constant 0 : index
    %c0_0 = arith.constant 0 : index
    %0 = vector.load %arg1[%c0, %c0_0] : memref<24x256xbf16, #tpu.memory_space<vmem>>, vector<24x256xbf16>
    %c0_1 = arith.constant 0 : index
    %c0_2 = arith.constant 0 : index
    %1 = vector.load %arg2[%c0_1, %c0_2] : memref<12x24xf32, #tpu.memory_space<vmem>>, vector<12x24xf32>
    %2 = arith.truncf %1 : vector<12x24xf32> to vector<12x24xbf16>
    %cst = arith.constant dense<0.000000e+00> : vector<12x256xf32>
    %3 = tpu.matmul %2, %0, %cst {dimension_numbers = #tpu.dot_dimension_numbers<[1], [0], [0], [1], [0, 0, 1, 1], [], []>} : vector<12x24xbf16>, vector<24x256xbf16>, vector<12x256xf32> -> vector<12x256xf32>
    %c0_3 = arith.constant 0 : index
    %c0_4 = arith.constant 0 : index
    %4 = vector.load %arg3[%c0_3, %c0_4] : memref<3x256xf32, #tpu.memory_space<vmem>>, vector<1x256xf32>
    %c1 = arith.constant 1 : index
    %c0_5 = arith.constant 0 : index
    %5 = vector.load %arg3[%c1, %c0_5] : memref<3x256xf32, #tpu.memory_space<vmem>>, vector<1x256xf32>
    %c2 = arith.constant 2 : index
    %c0_6 = arith.constant 0 : index
    %6 = vector.load %arg3[%c2, %c0_6] : memref<3x256xf32, #tpu.memory_space<vmem>>, vector<1x256xf32>
    %7 = vector.extract_strided_slice %3 {offsets = [0, 0], sizes = [1, 256], strides = [1, 1]} : vector<12x256xf32> to vector<1x256xf32>
    %8 = arith.mulf %7, %4 : vector<1x256xf32>
    %9 = vector.extract_strided_slice %3 {offsets = [1, 0], sizes = [1, 256], strides = [1, 1]} : vector<12x256xf32> to vector<1x256xf32>
    %10 = arith.mulf %9, %5 : vector<1x256xf32>
    %11 = arith.addf %8, %10 : vector<1x256xf32>
    %12 = vector.extract_strided_slice %3 {offsets = [2, 0], sizes = [1, 256], strides = [1, 1]} : vector<12x256xf32> to vector<1x256xf32>
    %13 = arith.mulf %12, %6 : vector<1x256xf32>
    %14 = arith.addf %11, %13 : vector<1x256xf32>
    %15 = vector.extract_strided_slice %3 {offsets = [3, 0], sizes = [1, 256], strides = [1, 1]} : vector<12x256xf32> to vector<1x256xf32>
    %16 = arith.addf %14, %15 : vector<1x256xf32>
    %c0_7 = arith.constant 0 : index
    %c0_8 = arith.constant 0 : index
    %17 = vector.load %arg4[%c0_7, %c0_8] : memref<3x256xf32, #tpu.memory_space<vmem>>, vector<1x256xf32>
    tpu.vector_store %arg4[%c0_7, %c0_8], %16 {strides = array<i32>} : memref<3x256xf32, #tpu.memory_space<vmem>>, vector<1x256xf32>,
    %18 = vector.extract_strided_slice %3 {offsets = [4, 0], sizes = [1, 256], strides = [1, 1]} : vector<12x256xf32> to vector<1x256xf32>
    %19 = arith.mulf %18, %4 : vector<1x256xf32>
    %20 = vector.extract_strided_slice %3 {offsets = [5, 0], sizes = [1, 256], strides = [1, 1]} : vector<12x256xf32> to vector<1x256xf32>
    %21 = arith.mulf %20, %5 : vector<1x256xf32>
    %22 = arith.addf %19, %21 : vector<1x256xf32>
    %23 = vector.extract_strided_slice %3 {offsets = [6, 0], sizes = [1, 256], strides = [1, 1]} : vector<12x256xf32> to vector<1x256xf32>
    %24 = arith.mulf %23, %6 : vector<1x256xf32>
    %25 = arith.addf %22, %24 : vector<1x256xf32>
    %26 = vector.extract_strided_slice %3 {offsets = [7, 0], sizes = [1, 256], strides = [1, 1]} : vector<12x256xf32> to vector<1x256xf32>
    %27 = arith.addf %25, %26 : vector<1x256xf32>
    %c1_9 = arith.constant 1 : index
    %c0_10 = arith.constant 0 : index
    %28 = vector.load %arg4[%c1_9, %c0_10] : memref<3x256xf32, #tpu.memory_space<vmem>>, vector<1x256xf32>
    tpu.vector_store %arg4[%c1_9, %c0_10], %27 {strides = array<i32>} : memref<3x256xf32, #tpu.memory_space<vmem>>, vector<1x256xf32>,
    %29 = vector.extract_strided_slice %3 {offsets = [8, 0], sizes = [1, 256], strides = [1, 1]} : vector<12x256xf32> to vector<1x256xf32>
    %30 = arith.mulf %29, %4 : vector<1x256xf32>
    %31 = vector.extract_strided_slice %3 {offsets = [9, 0], sizes = [1, 256], strides = [1, 1]} : vector<12x256xf32> to vector<1x256xf32>
    %32 = arith.mulf %31, %5 : vector<1x256xf32>
    %33 = arith.addf %30, %32 : vector<1x256xf32>
    %34 = vector.extract_strided_slice %3 {offsets = [10, 0], sizes = [1, 256], strides = [1, 1]} : vector<12x256xf32> to vector<1x256xf32>
    %35 = arith.mulf %34, %6 : vector<1x256xf32>
    %36 = arith.addf %33, %35 : vector<1x256xf32>
    %37 = vector.extract_strided_slice %3 {offsets = [11, 0], sizes = [1, 256], strides = [1, 1]} : vector<12x256xf32> to vector<1x256xf32>
    %38 = arith.addf %36, %37 : vector<1x256xf32>
    %c2_11 = arith.constant 2 : index
    %c0_12 = arith.constant 0 : index
    %39 = vector.load %arg4[%c2_11, %c0_12] : memref<3x256xf32, #tpu.memory_space<vmem>>, vector<1x256xf32>
    tpu.vector_store %arg4[%c2_11, %c0_12], %38 {strides = array<i32>} : memref<3x256xf32, #tpu.memory_space<vmem>>, vector<1x256xf32>,
    return
  }
  func.func @transform_0(%arg0: i32) -> (i32, i32) {
    %c0_i32 = arith.constant 0 : i32
    %c0_i32_0 = arith.constant 0 : i32
    return %c0_i32, %arg0 : i32, i32
  }
  func.func @transform_1(%arg0: i32) -> (i32, i32) {
    %c0_i32 = arith.constant 0 : i32
    %c0_i32_0 = arith.constant 0 : i32
    %c0_i32_1 = arith.constant 0 : i32
    return %c0_i32, %c0_i32_0 : i32, i32
  }
  func.func @transform_2(%arg0: i32) -> (i32, i32) {
    %c0_i32 = arith.constant 0 : i32
    %c0_i32_0 = arith.constant 0 : i32
    return %c0_i32, %arg0 : i32, i32
  }
  func.func @transform_3(%arg0: i32) -> (i32, i32) {
    %c0_i32 = arith.constant 0 : i32
    %c0_i32_0 = arith.constant 0 : i32
    return %c0_i32, %arg0 : i32, i32
  }
}

</mosaic_0001>

<llo_original>
// kernel: tpu_custom_call.1
$region0: #{tpu_custom_call.1}
  #allocation0 [shape = 'u32[]', space=smem, size = 0x4, offset = 0x4, fixed_abs, tag = 'smem constant byte address 0x4 - core index']
  #allocation1 [shape = 'u32[72,128]{1,0:T(1,128)}', space=vmem, size = 0x9000, scoped, tag = 'internal scratch']
  %s0 = inlined_call_operand.hbm [shape: bf16[24,256], index: 0, kind: input, shape index: {}]
  %s1 = inlined_call_operand.hbm [shape: f32[12,24], index: 1, kind: input, shape index: {}]
  %s2 = inlined_call_operand.hbm [shape: f32[3,256], index: 2, kind: input, shape index: {}]
  %s3 = inlined_call_operand.hbm [shape: f32[3,256], index: 3, kind: output, shape index: {}]
  %s4 = sld [smem:[#allocation0]]
  $region34: #{tpu_custom_call.1} parent=0
    _
  %s6 = ssub.s32 1, %s4
  %s7 = scalar_select 0, %s6, %s4
  $region1: #{tpu_custom_call.1} parent=0
    #allocation2 [shape = 'u8[12288]{0}', space=vmem, size = 0x3000, scoped, tag = 'input window, operand 0, single buffered']
    #allocation3 [shape = 's32[1]{0}', space=sflag, size = 0x4, scoped, tag = 'scoped memory for tpu_custom_call.1']
    #allocation4 [shape = 's32[1]{0}', space=sflag, size = 0x4, scoped, tag = 'scoped memory for tpu_custom_call.1']
    #allocation5 [shape = 'u8[8192]{0}', space=vmem, size = 0x2000, scoped, tag = 'input window, operand 1, single buffered']
    #allocation6 [shape = 's32[1]{0}', space=sflag, size = 0x4, scoped, tag = 'scoped memory for tpu_custom_call.1']
    #allocation7 [shape = 'u8[4096]{0}', space=vmem, size = 0x1000, scoped, tag = 'input window, operand 2, single buffered']
    #allocation8 [shape = 'u8[4096]{0}', space=vmem, size = 0x1000, scoped, tag = 'output window, operand 0, single buffered']
    %8 = vsyncpa [#allocation3], 0
    %9 = vsyncpa [#allocation6], 0
    %10 = vsyncpa [#allocation4], 0
    // Predicated region
    $region2: #{tpu_custom_call.1} parent=1 // pred_check
      _
    $region3: #{tpu_custom_call.1} parent=1 // pred_check_branch
      %12 = sbr.rel (0) target = $region5
    $region4: #{tpu_custom_call.1} parent=1 // pred_region
      %14 = vsyncadd [#allocation3], 0
      %s15 = sshll.u32 %s0, 4
      %s16 = int_to_ptr.hbm [resolvable:$true] %s15
      %s17 = sshll.u32 [#allocation2], 4
      %s18 = int_to_ptr.vmem [resolvable:$true] %s17
      %23 = dma.hbm_to_vmem [thread:$0]  %s16, 384, %s18, [#allocation3], 128, 128, 8
    $region5: #{tpu_custom_call.1} parent=1 // pred_fallthru
      _
    // Predicated region
    $region6: #{tpu_custom_call.1} parent=1 // pred_check
      _
    $region7: #{tpu_custom_call.1} parent=1 // pred_check_branch
      %25 = sbr.rel (0) target = $region9
    $region8: #{tpu_custom_call.1} parent=1 // pred_region
      %27 = vsyncadd [#allocation6], 0
      %s28 = sshll.u32 %s1, 4
      %s29 = int_to_ptr.hbm [resolvable:$true] %s28
      %s30 = sshll.u32 [#allocation5], 4
      %s31 = int_to_ptr.vmem [resolvable:$true] %s30
      %36 = dma.hbm_to_vmem [thread:$0]  %s29, 256, %s31, [#allocation6], 128, 128, 8
    $region9: #{tpu_custom_call.1} parent=1 // pred_fallthru
      _
    // Predicated region
    $region10: #{tpu_custom_call.1} parent=1 // pred_check
      _
    $region11: #{tpu_custom_call.1} parent=1 // pred_check_branch
      %38 = sbr.rel (0) target = $region13
    $region12: #{tpu_custom_call.1} parent=1 // pred_region
      %40 = vsyncadd [#allocation6], 0
      %s42 = sshll.u32 %s2, 4
      %s43 = int_to_ptr.hbm [resolvable:$true] %s42
      %s44 = sshll.u32 [#allocation7], 4
      %s45 = int_to_ptr.vmem [resolvable:$true] %s44
      %47 = dma.hbm_to_vmem [thread:$0]  %s43, 128, %s45, [#allocation6]
    $region13: #{tpu_custom_call.1} parent=1 // pred_fallthru
      _
    // Predicated region
    $region14: #{tpu_custom_call.1} parent=1 // pred_check
      _
    $region15: #{tpu_custom_call.1} parent=1 // pred_check_branch
      %49 = sbr.rel (0) target = $region17
    $region16: #{tpu_custom_call.1} parent=1 // pred_region
      %51 = dma.done [#allocation3], 384
    $region17: #{tpu_custom_call.1} parent=1 // pred_fallthru
      _
    // Predicated region
    $region18: #{tpu_custom_call.1} parent=1 // pred_check
      _
    $region19: #{tpu_custom_call.1} parent=1 // pred_check_branch
      %53 = sbr.rel (0) target = $region21
    $region20: #{tpu_custom_call.1} parent=1 // pred_region
      %55 = dma.done [#allocation6], 256
    $region21: #{tpu_custom_call.1} parent=1 // pred_fallthru
      _
    // Predicated region
    $region22: #{tpu_custom_call.1} parent=1 // pred_check
      _
    $region23: #{tpu_custom_call.1} parent=1 // pred_check_branch
      %57 = sbr.rel (0) target = $region25
    $region24: #{tpu_custom_call.1} parent=1 // pred_region
      %59 = dma.done [#allocation6], 128
    $region25: #{tpu_custom_call.1} parent=1 // pred_fallthru
      _
    %v61 = vld [vmem:[#allocation2] sm:$0xff]
    %v62 = vld [vmem:[#allocation2 + $0x8] sm:$0xff]
    %v63 = vld [vmem:[#allocation2 + $0x10] sm:$0xff]
    %v64 = vld [vmem:[#allocation5] sm:$0xff]
    %v65 = vld [vmem:[#allocation5 + $0x8] sm:$0xf]
    %v66 = vpack.c.bf16 %v65, %v64
    %v70 = vunpack.c.l.b16 %v61
    %v71 = vunpack.c.h.b16 %v61
    %v72 = vunpack.c.l.b16 %v62
    %v73 = vunpack.c.h.b16 %v62
    %v74 = vunpack.c.l.b16 %v63
    %v75 = vunpack.c.h.b16 %v63
    %v76 = vpack.c.b16 %v72, %v70
    %v77 = vpack.c.b16 %v73, %v71
    %v78 = vpack.c.b16 %v74, %v74
    %v79 = vpack.c.b16 %v75, %v75
    %vm82 = vcmask 195584
    %v84 = vsel %vm82, %v66, 0
    %vm86 = vcmask 1043456
    %v88 = vsel %vm86, %v78, 0
    %v91 = vsel %vm86, %v79, 0
    %93 = vmatpush.bf16.msra.mxu0 0
    %94 = vmatpush.bf16.msra.mxu0 0
    %95 = vmatpush.bf16.msra.mxu0 0
    %96 = vmatpush.bf16.msra.mxu0 0
    %97 = vmatpush.bf16.msra.mxu0 0
    %98 = vmatpush.bf16.msra.mxu0 0
    %99 = vmatpush.bf16.msra.mxu0 %v88
    %100 = vmatpush.bf16.msra.mxu0 %v76
    %101 = vmatmul.bf16.gmra.mxu0 %v84
    %v102 = vpop.f32.mrf.mxu0
    %v103 = vadd.f32 0.0, %v102
    %v104 = vpop.f32.mrf.mxu0
    %v105 = vadd.f32 0.0, %v104
    %106 = vdwg.mxu0
    %107 = vmatpush.bf16.msra.mxu0 0
    %108 = vmatpush.bf16.msra.mxu0 0
    %109 = vmatpush.bf16.msra.mxu0 0
    %110 = vmatpush.bf16.msra.mxu0 0
    %111 = vmatpush.bf16.msra.mxu0 0
    %112 = vmatpush.bf16.msra.mxu0 0
    %113 = vmatpush.bf16.msra.mxu0 %v91
    %114 = vmatpush.bf16.msra.mxu0 %v77
    %115 = vmatmul.bf16.gmra.mxu0 %v84
    %v116 = vpop.f32.mrf.mxu0
    %v117 = vadd.f32 0.0, %v116
    %v118 = vpop.f32.mrf.mxu0
    %v119 = vadd.f32 0.0, %v118
    %120 = vdwg.mxu0
    %v121 = vld [vmem:[#allocation7] ss:$4 sm:$0x3]
    %s122 = scalar_lea.vmem [#allocation7], 1
    %v123 = vld [vmem:[%s122] ss:$4 sm:$0x3]
    %s124 = scalar_lea.vmem [#allocation7], 2
    %v125 = vld [vmem:[%s124] ss:$4 sm:$0x3]
    %v127 = vperm.slane %v121, 0
    %v128 = vperm.slane %v121, 1
    %v131 = vmul.f32 %v103, %v127
    %v132 = vmul.f32 %v117, %v128
    %v134 = vperm.slane %v123, 0
    %v135 = vperm.slane %v123, 1
    %v138 = vmul.f32 %v103, %v134
    %v139 = vmul.f32 %v117, %v135
    %v142 = vrot.slane %v138, 1
    %v143 = vrot.slane %v139, 1
    %v146 = vadd.f32 %v131, %v142
    %v147 = vadd.f32 %v132, %v143
    %v149 = vperm.slane %v125, 0
    %v150 = vperm.slane %v125, 1
    %v153 = vmul.f32 %v103, %v149
    %v154 = vmul.f32 %v117, %v150
    %v157 = vrot.slane %v153, 2
    %v158 = vrot.slane %v154, 2
    %v161 = vadd.f32 %v146, %v157
    %v162 = vadd.f32 %v147, %v158
    %v165 = vrot.slane %v103, 3
    %v166 = vrot.slane %v117, 3
    %v169 = vadd.f32 %v161, %v165
    %v170 = vadd.f32 %v162, %v166
    %v173 = vrot.slane %v170, 7
    %vm174 = vcmask 1040384
    %v175 = vsel %vm174, %v169, %v173
    %v177 = vlaneseq
    %vm178 = vcmp.ge.s32.totalorder %v177, 0
    %vm179 = vcmp.lt.s32.totalorder %v177, 256
    %vm180 = vmand %vm178, %vm179
    %181 = vst.msk [vmem:[#allocation8] ss:$4 sm:$0x3] %vm180, %v175
    %182 = vst [vmem:[#allocation1] sm:$0xff] %v169
    %183 = vst [vmem:[#allocation1 + $0x9] sm:$0xff] %v170
    %s184 = scalar_lea.vmem [#allocation1], 4
    %v185 = vld [vmem:[%s184] ss:$9 sm:$0xff]
    %s187 = scalar_lea.vmem [#allocation8], 1
    %188 = vst.msk [vmem:[%s187] ss:$4 sm:$0x3] %vm180, %v185
    %v189 = vmul.f32 %v105, %v127
    %v190 = vmul.f32 %v119, %v128
    %v191 = vmul.f32 %v105, %v134
    %v192 = vmul.f32 %v119, %v135
    %v195 = vrot.slane %v191, 1
    %v196 = vrot.slane %v192, 1
    %v199 = vadd.f32 %v189, %v195
    %v200 = vadd.f32 %v190, %v196
    %v201 = vmul.f32 %v105, %v149
    %v202 = vmul.f32 %v119, %v150
    %v205 = vrot.slane %v201, 2
    %v206 = vrot.slane %v202, 2
    %v209 = vadd.f32 %v199, %v205
    %v210 = vadd.f32 %v200, %v206
    %v213 = vrot.slane %v105, 3
    %v214 = vrot.slane %v119, 3
    %v217 = vadd.f32 %v209, %v213
    %v218 = vadd.f32 %v210, %v214
    %v221 = vrot.slane %v218, 7
    %v222 = vsel %vm174, %v217, %v221
    %s224 = scalar_lea.vmem [#allocation8], 2
    %225 = vst.msk [vmem:[%s224] ss:$4 sm:$0x3] %vm180, %v222
    // Predicated region
    $region26: #{tpu_custom_call.1} parent=1 // pred_check
      _
    $region27: #{tpu_custom_call.1} parent=1 // pred_check_branch
      %227 = sbr.rel (0) target = $region29
    $region28: #{tpu_custom_call.1} parent=1 // pred_region
      %229 = vsyncadd [#allocation4], 0
      %s231 = sshll.u32 [#allocation8], 4
      %s232 = int_to_ptr.vmem [resolvable:$true] %s231
      %s233 = sshll.u32 %s3, 4
      %s234 = int_to_ptr.hbm [resolvable:$true] %s233
      %236 = dma.vmem_to_hbm [thread:$0]  %s232, 128, %s234, [#allocation4]
    $region29: #{tpu_custom_call.1} parent=1 // pred_fallthru
      _
    // Predicated region
    $region30: #{tpu_custom_call.1} parent=1 // pred_check
      _
    $region31: #{tpu_custom_call.1} parent=1 // pred_check_branch
      %238 = sbr.rel (0) target = $region33
    $region32: #{tpu_custom_call.1} parent=1 // pred_region
      %240 = dma.done [#allocation4], 128
    $region33: #{tpu_custom_call.1} parent=1 // pred_fallthru
      _
    %241 = vsyncpa [#allocation3], 1
    %242 = vsyncpa [#allocation6], 1
    %243 = vsyncpa [#allocation4], 1

</llo_original>
